<compile_context>
chip_gen: v7x
topology: tpu7x:2x2x1
jax: 0.10.0
libtpu: 0.0.40
codegen_flags: <defaults>
</compile_context>

<pallas_src>
import jax
import jax.numpy as jnp
from jax import lax
from jax.experimental import pallas as pl
from jax.experimental.pallas import tpu as pltpu


def _cdiv(a: int, b: int) -> int:
    return -(-a // b)


def _round_up(x: int, m: int) -> int:
    return _cdiv(x, m) * m


def _linear_kernel(x_ref, w_ref, b_ref, o_ref):
    # x_ref: (TM, TK)   w_ref: (TN, TK)  (PyTorch (out, in) layout)
    # b_ref: (1, TN)    o_ref: (TM, TN)  (f32; accumulated in place across K)
    k = pl.program_id(2)

    # Contract x's dim 1 with w's dim 1 (i.e. x @ w.T) on the MXU, f32 accumulation.
    part = lax.dot_general(
        x_ref[...],
        w_ref[...],
        dimension_numbers=(((1,), (1,)), ((), ())),
        preferred_element_type=jnp.float32,
    )

    @pl.when(k == 0)
    def _first():
        o_ref[...] = part + b_ref[...]

    @pl.when(k > 0)
    def _rest():
        o_ref[...] += part


def linear_probe(x, weight, bias, *, tm_max=512, tn_max=512, tk_max=1024):
    """y = x @ weight.T + bias  (PyTorch nn.Linear semantics).

    x:      (B, input_dim)          float32
    weight: (output_dim, input_dim) float32  (PyTorch layout, NOT transposed)
    bias:   (output_dim,)           float32
    returns (B, output_dim)         float32
    """
    B, in_dim = x.shape
    out_dim, in_dim_w = weight.shape
    assert in_dim_w == in_dim
    assert bias.shape == (out_dim,)
    assert x.dtype == jnp.float32, "f32 path accumulates in the output block"

    # --- M tile: balanced, 8-aligned (or full dim). Ragged last block is masked. ---
    if B <= tm_max:
        tm = B
    else:
        tm = _round_up(_cdiv(B, _cdiv(B, tm_max)), 8)
    grid_m = _cdiv(B, tm)

    # --- N tile: narrow heads keep tn == out_dim (full-dim block, exempt from the
    # 128-lane rule) so weight traffic is not inflated by 128/out_dim. --------------
    if out_dim <= tn_max:
        tn = out_dim
    else:
        tn = _round_up(_cdiv(out_dim, _cdiv(out_dim, tn_max)), 128)
    grid_n = _cdiv(out_dim, tn)

    # --- K tile: contraction dim must be exactly covered. Prefer a tk dividing
    # in_dim (no padded copy of the weight in HBM); zero-pad only as fallback. ------
    if in_dim <= tk_max:
        tk, Kp = in_dim, in_dim
    else:
        tk = 0
        t = (tk_max // 128) * 128
        while t >= 128:
            if in_dim % t == 0:
                tk = t
                break
            t -= 128
        if tk:
            Kp = in_dim
        else:
            # Fallback: balanced, 128-aligned tk + exact zero padding (correctness).
            tk = _round_up(_cdiv(in_dim, _cdiv(in_dim, tk_max)), 128)
            Kp = _round_up(in_dim, tk)
    grid_k = Kp // tk

    x_p = x if Kp == in_dim else jnp.pad(x, ((0, 0), (0, Kp - in_dim)))
    w_p = weight if Kp == in_dim else jnp.pad(weight, ((0, 0), (0, Kp - in_dim)))
    b2 = bias.reshape(1, out_dim)

    grid = (grid_m, grid_n, grid_k)

    # VMEM budget: double-buffered x/W/bias blocks + (conservatively) double output
    # block; 2x headroom for Mosaic internal scratch, capped at 48 MiB (v7x-safe).
    tile_bytes = 4 * (2 * (tm * tk + tn * tk + tn) + 2 * tm * tn)
    vmem_limit = int(min(max(2 * tile_bytes, 32 << 20), 48 << 20))

    cost = pl.CostEstimate(
        flops=2 * B * out_dim * Kp,
        transcendentals=0,
        bytes_accessed=4 * (B * Kp * grid_n + out_dim * Kp * grid_m
                            + out_dim + B * out_dim),
    )

    return pl.pallas_call(
        _linear_kernel,
        out_shape=jax.ShapeDtypeStruct((B, out_dim), x.dtype),
        grid=grid,
        in_specs=[
            pl.BlockSpec((tm, tk), lambda i, j, k: (i, k)),   # x tile
            pl.BlockSpec((tn, tk), lambda i, j, k: (j, k)),   # weight tile (out, in)
            pl.BlockSpec((1, tn), lambda i, j, k: (0, j)),    # bias tile (constant in K)
        ],
        out_specs=pl.BlockSpec((tm, tn), lambda i, j, k: (i, j)),
        compiler_params=pltpu.CompilerParams(
            dimension_semantics=("parallel", "parallel", "arbitrary"),
            vmem_limit_bytes=vmem_limit,
        ),
        cost_estimate=cost,
    )(x_p, w_p, b2)


if __name__ == "__main__":
    key = jax.random.PRNGKey(0)
    k_x, k_w, k_b = jax.random.split(key, 3)

    batch = 8
    input_dim = 32
    output_dim = 16

    # Deterministic synthetic parameters (nn.Linear-shaped).
    x = jax.random.normal(k_x, (batch, input_dim), dtype=jnp.float32)
    bound = 1.0 / (input_dim ** 0.5)
    weight = jax.random.uniform(
        k_w, (output_dim, input_dim), minval=-bound, maxval=bound, dtype=jnp.float32
    )
    bias = jax.random.uniform(
        k_b, (output_dim,), minval=-bound, maxval=bound, dtype=jnp.float32
    )

    y = linear_probe(x, weight, bias)
    y = jax.block_until_ready(y)

    # Reference check (PyTorch nn.Linear semantics).
    y_ref = x @ weight.T + bias
    assert y.shape == (batch, output_dim)
    assert jnp.allclose(y, y_ref, atol=1e-5, rtol=1e-5)

    print("KERNEL_OK")
</pallas_src>

<mosaic_0001>
module attributes {stable_mosaic.version = 11 : i64} {
  func.func @_linear_kernel(%arg0: i32, %arg1: i32, %arg2: i32, %arg3: memref<8x32xf32, #tpu.memory_space<vmem>>, %arg4: memref<16x32xf32, #tpu.memory_space<vmem>>, %arg5: memref<1x16xf32, #tpu.memory_space<vmem>>, %arg6: memref<8x16xf32, #tpu.memory_space<vmem>>) attributes {dimension_semantics = [#tpu.dimension_semantics<parallel>, #tpu.dimension_semantics<parallel>, #tpu.dimension_semantics<arbitrary>], iteration_bounds = array<i64: 1, 1, 1>, scalar_prefetch = 0 : i64, scratch_operands = 0 : i64, tpu.core_type = #tpu.core_type<tc>, window_params = [{transform_indices = @transform_0, window_bounds = array<i64: 8, 32>}, {transform_indices = @transform_1, window_bounds = array<i64: 16, 32>}, {transform_indices = @transform_2, window_bounds = array<i64: 1, 16>}, {transform_indices = @transform_3, window_bounds = array<i64: 8, 16>}]} {
    %c0 = arith.constant 0 : index
    %c0_0 = arith.constant 0 : index
    %0 = vector.load %arg3[%c0, %c0_0] : memref<8x32xf32, #tpu.memory_space<vmem>>, vector<8x32xf32>
    %c0_1 = arith.constant 0 : index
    %c0_2 = arith.constant 0 : index
    %1 = vector.load %arg4[%c0_1, %c0_2] : memref<16x32xf32, #tpu.memory_space<vmem>>, vector<16x32xf32>
    %cst = arith.constant dense<0.000000e+00> : vector<8x16xf32>
    %2 = tpu.matmul %0, %1, %cst {dimension_numbers = #tpu.dot_dimension_numbers<[1], [1], [0], [0], [0, 0, 1, 0], [], []>} : vector<8x32xf32>, vector<16x32xf32>, vector<8x16xf32> -> vector<8x16xf32>
    %c0_i32 = arith.constant 0 : i32
    %3 = arith.cmpi eq, %arg2, %c0_i32 : i32
    %4 = arith.extui %3 : i1 to i32
    %c0_i32_3 = arith.constant 0 : i32
    %5 = arith.cmpi ne, %4, %c0_i32_3 : i32
    scf.if %5 {
      %c0_6 = arith.constant 0 : index
      %c0_7 = arith.constant 0 : index
      %9 = vector.load %arg5[%c0_6, %c0_7] : memref<1x16xf32, #tpu.memory_space<vmem>>, vector<1x16xf32>
      %10 = vector.broadcast %9 : vector<1x16xf32> to vector<8x16xf32>
      %11 = arith.addf %2, %10 : vector<8x16xf32>
      %c0_8 = arith.constant 0 : index
      %c0_9 = arith.constant 0 : index
      %12 = vector.load %arg6[%c0_8, %c0_9] : memref<8x16xf32, #tpu.memory_space<vmem>>, vector<8x16xf32>
      tpu.vector_store %arg6[%c0_8, %c0_9], %11 {strides = array<i32>} : memref<8x16xf32, #tpu.memory_space<vmem>>, vector<8x16xf32>,
    } else {
    }
    %c0_i32_4 = arith.constant 0 : i32
    %6 = arith.cmpi sgt, %arg2, %c0_i32_4 : i32
    %7 = arith.extui %6 : i1 to i32
    %c0_i32_5 = arith.constant 0 : i32
    %8 = arith.cmpi ne, %7, %c0_i32_5 : i32
    scf.if %8 {
      %c0_6 = arith.constant 0 : index
      %c0_7 = arith.constant 0 : index
      %9 = vector.load %arg6[%c0_6, %c0_7] : memref<8x16xf32, #tpu.memory_space<vmem>>, vector<8x16xf32>
      %10 = arith.addf %9, %2 : vector<8x16xf32>
      %c0_8 = arith.constant 0 : index
      %c0_9 = arith.constant 0 : index
      %11 = vector.load %arg6[%c0_8, %c0_9] : memref<8x16xf32, #tpu.memory_space<vmem>>, vector<8x16xf32>
      tpu.vector_store %arg6[%c0_8, %c0_9], %10 {strides = array<i32>} : memref<8x16xf32, #tpu.memory_space<vmem>>, vector<8x16xf32>,
    } else {
    }
    return
  }
  func.func @transform_0(%arg0: i32, %arg1: i32, %arg2: i32) -> (i32, i32) {
    %c0_i32 = arith.constant 0 : i32
    return %arg0, %arg2 : i32, i32
  }
  func.func @transform_1(%arg0: i32, %arg1: i32, %arg2: i32) -> (i32, i32) {
    %c0_i32 = arith.constant 0 : i32
    return %arg1, %arg2 : i32, i32
  }
  func.func @transform_2(%arg0: i32, %arg1: i32, %arg2: i32) -> (i32, i32) {
    %c0_i32 = arith.constant 0 : i32
    %c0_i32_0 = arith.constant 0 : i32
    return %c0_i32, %arg1 : i32, i32
  }
  func.func @transform_3(%arg0: i32, %arg1: i32, %arg2: i32) -> (i32, i32) {
    %c0_i32 = arith.constant 0 : i32
    return %arg0, %arg1 : i32, i32
  }
}

</mosaic_0001>

<llo_original>
// kernel: tpu_custom_call.1
$region0: #{tpu_custom_call.1}
  #allocation0 [shape = 'u32[]', space=smem, size = 0x4, offset = 0x4, fixed_abs, tag = 'smem constant byte address 0x4 - core index']
  #allocation1 [shape = 'u32[144,128]{1,0:T(1,128)}', space=vmem, size = 0x12000, scoped, tag = 'internal scratch']
  %s0 = inlined_call_operand.hbm [shape: f32[8,32], index: 0, kind: input, shape index: {}]
  %s1 = inlined_call_operand.hbm [shape: f32[16,32], index: 1, kind: input, shape index: {}]
  %s2 = inlined_call_operand.vmem [shape: f32[1,16], index: 2, kind: input, shape index: {}]
  %s3 = inlined_call_operand.hbm [shape: f32[8,16], index: 3, kind: output, shape index: {}]
  %s4 = sld [smem:[#allocation0]]
  $region38: #{tpu_custom_call.1} parent=0
    _
  %s6 = ssub.s32 1, %s4
  %s7 = scalar_select 0, %s6, %s4
  $region1: #{tpu_custom_call.1} parent=0
    #allocation2 [shape = 'u8[4096]{0}', space=vmem, size = 0x1000, scoped, tag = 'input window, operand 0, single buffered']
    #allocation3 [shape = 's32[1]{0}', space=sflag, size = 0x4, scoped, tag = 'scoped memory for tpu_custom_call.1']
    #allocation4 [shape = 's32[1]{0}', space=sflag, size = 0x4, scoped, tag = 'scoped memory for tpu_custom_call.1']
    #allocation5 [shape = 'u8[8192]{0}', space=vmem, size = 0x2000, scoped, tag = 'input window, operand 1, single buffered']
    #allocation6 [shape = 's32[1]{0}', space=sflag, size = 0x4, scoped, tag = 'scoped memory for tpu_custom_call.1']
    #allocation7 [shape = 'u8[4096]{0}', space=vmem, size = 0x1000, scoped, tag = 'output window, operand 0, single buffered']
    %8 = vsyncpa [#allocation3], 0
    %9 = vsyncpa [#allocation6], 0
    %10 = vsyncpa [#allocation4], 0
    // Predicated region
    $region2: #{tpu_custom_call.1} parent=1 // pred_check
      _
    $region3: #{tpu_custom_call.1} parent=1 // pred_check_branch
      %12 = sbr.rel (0) target = $region5
    $region4: #{tpu_custom_call.1} parent=1 // pred_region
      %s14 = ssub.s32 128, 128
      %15 = vsyncadd [#allocation3], %s14
      %s17 = sshll.u32 [#allocation2], 4
      %s18 = int_to_ptr.vmem [resolvable:$true] %s17
      %20 = dma.hbm_to_vmem [thread:$0]  %s0, 128, %s18, [#allocation3]
    $region5: #{tpu_custom_call.1} parent=1 // pred_fallthru
      _
    // Predicated region
    $region6: #{tpu_custom_call.1} parent=1 // pred_check
      _
    $region7: #{tpu_custom_call.1} parent=1 // pred_check_branch
      %22 = sbr.rel (0) target = $region9
    $region8: #{tpu_custom_call.1} parent=1 // pred_region
      %s24 = ssub.s32 256, 256
      %25 = vsyncadd [#allocation6], %s24
      %s26 = sshll.u32 [#allocation5], 4
      %s27 = int_to_ptr.vmem [resolvable:$true] %s26
      %32 = dma.hbm_to_vmem [thread:$0]  %s1, 256, %s27, [#allocation6], 128, 128, 8
    $region9: #{tpu_custom_call.1} parent=1 // pred_fallthru
      _
    // Predicated region
    $region10: #{tpu_custom_call.1} parent=1 // pred_check
      _
    $region11: #{tpu_custom_call.1} parent=1 // pred_check_branch
      %34 = sbr.rel (0) target = $region13
    $region12: #{tpu_custom_call.1} parent=1 // pred_region
      _
    $region13: #{tpu_custom_call.1} parent=1 // pred_fallthru
      _
    // Predicated region
    $region14: #{tpu_custom_call.1} parent=1 // pred_check
      _
    $region15: #{tpu_custom_call.1} parent=1 // pred_check_branch
      %36 = sbr.rel (0) target = $region17
    $region16: #{tpu_custom_call.1} parent=1 // pred_region
      %37 = dma.done [#allocation3], 128
    $region17: #{tpu_custom_call.1} parent=1 // pred_fallthru
      _
    // Predicated region
    $region18: #{tpu_custom_call.1} parent=1 // pred_check
      _
    $region19: #{tpu_custom_call.1} parent=1 // pred_check_branch
      %39 = sbr.rel (0) target = $region21
    $region20: #{tpu_custom_call.1} parent=1 // pred_region
      %40 = dma.done [#allocation6], 256
    $region21: #{tpu_custom_call.1} parent=1 // pred_fallthru
      _
    %v41 = vld [vmem:[#allocation2] sm:$0xff]
    %v42 = vld [vmem:[#allocation5] sm:$0xff]
    %v43 = vld [vmem:[#allocation5 + $0x8] sm:$0xff]
    %vm44 = vcmask 261120
    %v46 = vsel %vm44, %v41, 0
    %v49 = vsel %vm44, %v42, 0
    %v52 = vsel %vm44, %v43, 0
    %54 = vmatprep.subr.mxu0 0.0
    %55 = vmatpush1.xpose.msra.mxu0 %v49
    %56 = vmatprep.subr.mxu0 0.0
    %57 = vmatpush1.xpose.msra.mxu0 %v52
    %58 = vmatprep.subr.mxu0 0.0
    %59 = vmatpush1.xpose.msra.mxu0 0.0
    %60 = vmatprep.subr.mxu0 0.0
    %61 = vmatpush1.xpose.msra.mxu0 0.0
    %62 = vmatprep.subr.mxu0 0.0
    %63 = vmatpush1.xpose.msra.mxu0 0.0
    %64 = vmatprep.subr.mxu0 0.0
    %65 = vmatpush1.xpose.msra.mxu0 0.0
    %66 = vmatprep.subr.mxu0 0.0
    %67 = vmatpush1.xpose.msra.mxu0 0.0
    %68 = vmatprep.subr.mxu0 0.0
    %69 = vmatpush1.xpose.msra.mxu0 0.0
    %70 = vmatprep.subr.mxu0 0.0
    %71 = vmatpush1.xpose.msra.mxu0 0.0
    %72 = vmatprep.subr.mxu0 0.0
    %73 = vmatpush1.xpose.msra.mxu0 0.0
    %74 = vmatprep.subr.mxu0 0.0
    %75 = vmatpush1.xpose.msra.mxu0 0.0
    %76 = vmatprep.subr.mxu0 0.0
    %77 = vmatpush1.xpose.msra.mxu0 0.0
    %78 = vmatprep.subr.mxu0 0.0
    %79 = vmatpush1.xpose.msra.mxu0 0.0
    %80 = vmatprep.subr.mxu0 0.0
    %81 = vmatpush1.xpose.msra.mxu0 0.0
    %82 = vmatprep.subr.mxu0 0.0
    %83 = vmatpush1.xpose.msra.mxu0 0.0
    %84 = vmatprep.subr.mxu0 0.0
    %85 = vmatpush1.xpose.msra.mxu0 0.0
    %86 = vmatprep.subr.mxu0 0.0
    %87 = vmatpush1.xpose.msra.mxu0 0.0
    %88 = vmatprep.subr.mxu0 0.0
    %89 = vmatpush1.xpose.msra.mxu0 0.0
    %90 = vmatprep.subr.mxu0 0.0
    %91 = vmatpush1.xpose.msra.mxu0 0.0
    %92 = vmatprep.subr.mxu0 0.0
    %93 = vmatpush1.xpose.msra.mxu0 0.0
    %94 = vmatprep.subr.mxu0 0.0
    %95 = vmatpush1.xpose.msra.mxu0 0.0
    %96 = vmatprep.subr.mxu0 0.0
    %97 = vmatpush1.xpose.msra.mxu0 0.0
    %98 = vmatprep.subr.mxu0 0.0
    %99 = vmatpush1.xpose.msra.mxu0 0.0
    %100 = vmatprep.subr.mxu0 0.0
    %101 = vmatpush1.xpose.msra.mxu0 0.0
    %102 = vmatprep.subr.mxu0 0.0
    %103 = vmatpush1.xpose.msra.mxu0 0.0
    %104 = vmatprep.subr.mxu0 0.0
    %105 = vmatpush1.xpose.msra.mxu0 0.0
    %106 = vmatprep.subr.mxu0 0.0
    %107 = vmatpush1.xpose.msra.mxu0 0.0
    %108 = vmatprep.subr.mxu0 0.0
    %109 = vmatpush1.xpose.msra.mxu0 0.0
    %110 = vmatprep.subr.mxu0 0.0
    %111 = vmatpush1.xpose.msra.mxu0 0.0
    %112 = vmatprep.subr.mxu0 0.0
    %113 = vmatpush1.xpose.msra.mxu0 0.0
    %114 = vmatprep.subr.mxu0 0.0
    %115 = vmatpush1.xpose.msra.mxu0 0.0
    %116 = vmatprep.subr.mxu0 0.0
    %117 = vmatpush1.xpose.msra.mxu0 0.0
    %118 = vmatprep.mubr.f32.mxu0 0.0
    %119 = vmatmul.mubr.f32.gmra.mrb[0].mxu0 %v46
    %v120 = vpop.f32.mrb[0].mxu0
    %v121 = vadd.f32 0.0, %v120
    %v122 = vpop.f32.mrb[0].mxu0
    %123 = vdwg.mxu0
    %p124 = scmp.eq.s32.totalorder 0, 0
    // Predicated region
    $region22: #{tpu_custom_call.1} parent=1 // pred_check
      %p125 = pneg %p124
    $region23: #{tpu_custom_call.1} parent=1 // pred_check_branch
      %127 = sbr.rel (%p125) target = $region25
    $region24: #{tpu_custom_call.1} parent=1 // pred_region
      %v128 = vld [vmem:[%s2] sm:$0x1]
      %v130 = vlaneseq
      %v131 = vshrl.u32 %v130, 7
      %v132 = vsub.s32 0, %v131
      %v133 = vrot.slane %v128, %v132
      %v135 = vadd.f32 %v121, %v133
      %vm136 = vcmask 130048
      %137 = vst.msk [vmem:[#allocation7] sm:$0xff] %vm136, %v135
    $region25: #{tpu_custom_call.1} parent=1 // pred_fallthru
      _
    %p138 = scmp.gt.s32.totalorder 0, 0
    // Predicated region
    $region26: #{tpu_custom_call.1} parent=1 // pred_check
      %p139 = pneg %p138
    $region27: #{tpu_custom_call.1} parent=1 // pred_check_branch
      %141 = sbr.rel (%p139) target = $region29
    $region28: #{tpu_custom_call.1} parent=1 // pred_region
      %v142 = vld [vmem:[#allocation7] sm:$0xff]
      %v143 = vadd.f32 %v142, %v121
      %vm144 = vcmask 130048
      %145 = vst.msk [vmem:[#allocation7] sm:$0xff] %vm144, %v143
    $region29: #{tpu_custom_call.1} parent=1 // pred_fallthru
      _
    // Predicated region
    $region30: #{tpu_custom_call.1} parent=1 // pred_check
      _
    $region31: #{tpu_custom_call.1} parent=1 // pred_check_branch
      %147 = sbr.rel (0) target = $region33
    $region32: #{tpu_custom_call.1} parent=1 // pred_region
      %s149 = ssub.s32 128, 128
      %150 = vsyncadd [#allocation4], %s149
      %s152 = sshll.u32 [#allocation7], 4
      %s153 = int_to_ptr.vmem [resolvable:$true] %s152
      %155 = dma.vmem_to_hbm [thread:$0]  %s153, 128, %s3, [#allocation4]
    $region33: #{tpu_custom_call.1} parent=1 // pred_fallthru
      _
    // Predicated region
    $region34: #{tpu_custom_call.1} parent=1 // pred_check
      _
    $region35: #{tpu_custom_call.1} parent=1 // pred_check_branch
      %157 = sbr.rel (0) target = $region37
    $region36: #{tpu_custom_call.1} parent=1 // pred_region
      %158 = dma.done [#allocation4], 128
    $region37: #{tpu_custom_call.1} parent=1 // pred_fallthru
      _
    %159 = vsyncpa [#allocation3], 1
    %160 = vsyncpa [#allocation6], 1
    %161 = vsyncpa [#allocation4], 1

</llo_original>
